<compile_context>
chip_gen: v5e
topology: v5e:2x2
jax: 0.10.0
libtpu: 0.0.40
codegen_flags: <defaults>
</compile_context>

<pallas_src>
import functools

import jax
import jax.numpy as jnp
from jax.experimental import pallas as pl
from jax.experimental.pallas import tpu as pltpu


_VPU_HIDDEN_MAX_C = 8  # below this contraction size, skip the MXU for the hidden layer


def _round_up(x, m):
    return ((x + m - 1) // m) * m


def vae_forward_kernel(eps_ref, x_ref, wh_ref, bh_ref, wheads_ref, bheads_ref, out_ref):
    """One batch tile.

    eps_ref:    [TB, D]
    x_ref:      [TB, C]
    wh_ref:     [C, H]      (f32 when C <= 8 -> VPU path, else bf16 -> MXU path)
    bh_ref:     [1, H]      (f32)
    wheads_ref: [H, 2*D]    (bf16; cols [0:D] = W_mu, cols [D:2D] = W_logvar)
    bheads_ref: [1, 2*D]    (f32)
    out_ref:    [TB, D]
    """
    D = out_ref.shape[-1]
    C = x_ref.shape[-1]

    x = x_ref[...]

    if C <= _VPU_HIDDEN_MAX_C:
        # Tiny K: broadcast-FMA on the VPU beats a <2%-utilized MXU push/pop.
        hpre = bh_ref[...]                                   # [1, H] -> broadcasts
        for c in range(C):                                   # static unroll
            hpre = hpre + x[:, c:c + 1] * wh_ref[c:c + 1, :]
    else:
        hpre = (
            jnp.dot(x.astype(wh_ref.dtype), wh_ref[...],
                    preferred_element_type=jnp.float32)
            + bh_ref[...]
        )
    h = jnp.tanh(hpre)                                       # f32 (EUP)

    # Fused mu|log_var head: single bf16 MXU matmul, f32 accumulation.
    heads = (
        jnp.dot(h.astype(wheads_ref.dtype), wheads_ref[...],
                preferred_element_type=jnp.float32)
        + bheads_ref[...]
    )
    mu = heads[:, :D]
    log_var = heads[:, D:]

    # Reparametrization: eps * sigma + mu, with sigma = exp(0.5*log_var) == sqrt(exp(log_var))
    sigma = jnp.exp(0.5 * log_var)
    out_ref[...] = (eps_ref[...] * sigma + mu).astype(out_ref.dtype)


def prepare_params(params):
    """One-time packing/casting of module params (hoisted out of the per-call forward)."""
    wh, bh, wmu, bmu, wlv, blv = params  # [in, out] layout
    C = wh.shape[0]
    f32, bf16 = jnp.float32, jnp.bfloat16
    # Pack both heads into one [H, 2*D] weight slab so mu/log_var share a single matmul.
    wheads = jnp.concatenate([wmu, wlv], axis=1).astype(bf16)
    bheads = jnp.concatenate([bmu, blv], axis=1).astype(f32)
    wh_p = wh.astype(f32 if C <= _VPU_HIDDEN_MAX_C else bf16)
    return wh_p, bh.astype(f32), wheads, bheads


@functools.partial(jax.jit, static_argnames=("block_b",))
def vae_forward(epsilon, x, prepared, *, block_b=256):
    """epsilon: [B, data_dim], x: [B, context_dim] -> y: [B, data_dim] (f32)."""
    wh, bh, wheads, bheads = prepared
    B, C = x.shape
    H = wh.shape[1]
    D = epsilon.shape[1]

    # Batch tile: large (default 256 rows) for HBM efficiency, multiple of 8,
    # but capped at ceil(B/2) so the parallel grid keeps >= 2 tiles (2 TCs on v7x).
    half = _round_up(max(-(-B // 2), 1), 8)
    TB = max(8, min(block_b, half))
    grid = (pl.cdiv(B, TB),)

    f32 = jnp.float32
    out = pl.pallas_call(
        vae_forward_kernel,
        out_shape=jax.ShapeDtypeStruct((B, D), f32),
        grid_spec=pltpu.PrefetchScalarGridSpec(
            num_scalar_prefetch=0,
            grid=grid,
            in_specs=[
                pl.BlockSpec((TB, D), lambda i: (i, 0)),       # epsilon tile
                pl.BlockSpec((TB, C), lambda i: (i, 0)),       # x tile
                pl.BlockSpec((C, H), lambda i: (0, 0)),        # W_h (VMEM-resident)
                pl.BlockSpec((1, H), lambda i: (0, 0)),        # b_h
                pl.BlockSpec((H, 2 * D), lambda i: (0, 0)),    # packed head weights
                pl.BlockSpec((1, 2 * D), lambda i: (0, 0)),    # packed head biases
            ],
            out_specs=pl.BlockSpec((TB, D), lambda i: (i, 0)),
        ),
        compiler_params=pltpu.CompilerParams(
            dimension_semantics=("parallel",),
            vmem_limit_bytes=32 * 1024 * 1024,
        ),
    )(epsilon.astype(f32), x.astype(f32), wh, bh, wheads, bheads)
    return out


def init_params(key, context_dim, hidden_dim, data_dim):
    """Deterministic PyTorch-style (uniform +-1/sqrt(fan_in)) init, stored as [in, out]."""
    ks = jax.random.split(key, 6)

    def lin(kw, kb, fan_in, fan_out):
        bound = 1.0 / jnp.sqrt(fan_in)
        w = jax.random.uniform(kw, (fan_in, fan_out), jnp.float32, -bound, bound)
        b = jax.random.uniform(kb, (1, fan_out), jnp.float32, -bound, bound)
        return w, b

    wh, bh = lin(ks[0], ks[1], context_dim, hidden_dim)
    wmu, bmu = lin(ks[2], ks[3], hidden_dim, data_dim)
    wlv, blv = lin(ks[4], ks[5], hidden_dim, data_dim)
    return wh, bh, wmu, bmu, wlv, blv


def vae_forward_ref(epsilon, x, params):
    wh, bh, wmu, bmu, wlv, blv = params
    h = jnp.tanh(x @ wh + bh)
    mu = h @ wmu + bmu
    log_var = h @ wlv + blv
    return epsilon * jnp.sqrt(jnp.exp(log_var)) + mu


if __name__ == "__main__":
    # Small shapes consistent with the module (constrain_mean=False path).
    B, context_dim, hidden_dim, data_dim = 64, 2, 32, 2

    key = jax.random.PRNGKey(0)
    k_eps, k_x, k_p = jax.random.split(key, 3)

    epsilon = jax.random.normal(k_eps, (B, data_dim), jnp.float32)
    x = jax.random.normal(k_x, (B, context_dim), jnp.float32)
    params = init_params(k_p, context_dim, hidden_dim, data_dim)
    prepared = prepare_params(params)

    y = vae_forward(epsilon, x, prepared, block_b=256)
    y = jax.block_until_ready(y)

    y_ref = vae_forward_ref(epsilon, x, params)
    assert y.shape == (B, data_dim)
    # bf16 head matmul -> loosened tolerance vs the f32 reference.
    assert jnp.allclose(y, y_ref, atol=5e-2, rtol=5e-2), "mismatch vs. reference"

    print("KERNEL_OK")
</pallas_src>

<mosaic_0001>
module attributes {stable_mosaic.version = 11 : i64} {
  func.func @vae_forward_kernel(%arg0: i32, %arg1: memref<32x2xf32, #tpu.memory_space<vmem>>, %arg2: memref<32x2xf32, #tpu.memory_space<vmem>>, %arg3: memref<2x32xf32, #tpu.memory_space<vmem>>, %arg4: memref<1x32xf32, #tpu.memory_space<vmem>>, %arg5: memref<32x4xbf16, #tpu.memory_space<vmem>>, %arg6: memref<1x4xf32, #tpu.memory_space<vmem>>, %arg7: memref<32x2xf32, #tpu.memory_space<vmem>>) attributes {dimension_semantics = [#tpu.dimension_semantics<parallel>], iteration_bounds = array<i64: 2>, scalar_prefetch = 0 : i64, scratch_operands = 0 : i64, tpu.core_type = #tpu.core_type<tc>, window_params = [{transform_indices = @transform_0, window_bounds = array<i64: 32, 2>}, {transform_indices = @transform_1, window_bounds = array<i64: 32, 2>}, {pipeline_mode = #tpu.pipeline_mode<synchronous>, transform_indices = @transform_2, window_bounds = array<i64: 2, 32>}, {pipeline_mode = #tpu.pipeline_mode<synchronous>, transform_indices = @transform_3, window_bounds = array<i64: 1, 32>}, {pipeline_mode = #tpu.pipeline_mode<synchronous>, transform_indices = @transform_4, window_bounds = array<i64: 32, 4>}, {pipeline_mode = #tpu.pipeline_mode<synchronous>, transform_indices = @transform_5, window_bounds = array<i64: 1, 4>}, {transform_indices = @transform_6, window_bounds = array<i64: 32, 2>}]} {
    %c0 = arith.constant 0 : index
    %c0_0 = arith.constant 0 : index
    %0 = vector.load %arg2[%c0, %c0_0] : memref<32x2xf32, #tpu.memory_space<vmem>>, vector<32x2xf32>
    %c0_1 = arith.constant 0 : index
    %c0_2 = arith.constant 0 : index
    %1 = vector.load %arg4[%c0_1, %c0_2] : memref<1x32xf32, #tpu.memory_space<vmem>>, vector<1x32xf32>
    %2 = vector.extract_strided_slice %0 {offsets = [0, 0], sizes = [32, 1], strides = [1, 1]} : vector<32x2xf32> to vector<32x1xf32>
    %c0_3 = arith.constant 0 : index
    %c0_4 = arith.constant 0 : index
    %3 = vector.load %arg3[%c0_3, %c0_4] : memref<2x32xf32, #tpu.memory_space<vmem>>, vector<1x32xf32>
    %4 = vector.broadcast %2 : vector<32x1xf32> to vector<32x32xf32>
    %5 = vector.broadcast %3 : vector<1x32xf32> to vector<32x32xf32>
    %6 = arith.mulf %4, %5 : vector<32x32xf32>
    %7 = vector.broadcast %1 : vector<1x32xf32> to vector<32x32xf32>
    %8 = arith.addf %7, %6 : vector<32x32xf32>
    %9 = vector.extract_strided_slice %0 {offsets = [0, 1], sizes = [32, 1], strides = [1, 1]} : vector<32x2xf32> to vector<32x1xf32>
    %c1 = arith.constant 1 : index
    %c0_5 = arith.constant 0 : index
    %10 = vector.load %arg3[%c1, %c0_5] : memref<2x32xf32, #tpu.memory_space<vmem>>, vector<1x32xf32>
    %11 = vector.broadcast %9 : vector<32x1xf32> to vector<32x32xf32>
    %12 = vector.broadcast %10 : vector<1x32xf32> to vector<32x32xf32>
    %13 = arith.mulf %11, %12 : vector<32x32xf32>
    %14 = arith.addf %8, %13 : vector<32x32xf32>
    %15 = math.tanh %14 : vector<32x32xf32>
    %16 = arith.truncf %15 : vector<32x32xf32> to vector<32x32xbf16>
    %c0_6 = arith.constant 0 : index
    %c0_7 = arith.constant 0 : index
    %17 = vector.load %arg5[%c0_6, %c0_7] : memref<32x4xbf16, #tpu.memory_space<vmem>>, vector<32x4xbf16>
    %cst = arith.constant dense<0.000000e+00> : vector<32x4xf32>
    %18 = tpu.matmul %16, %17, %cst {dimension_numbers = #tpu.dot_dimension_numbers<[1], [0], [0], [1], [0, 0, 1, 1], [], []>} : vector<32x32xbf16>, vector<32x4xbf16>, vector<32x4xf32> -> vector<32x4xf32>
    %c0_8 = arith.constant 0 : index
    %c0_9 = arith.constant 0 : index
    %19 = vector.load %arg6[%c0_8, %c0_9] : memref<1x4xf32, #tpu.memory_space<vmem>>, vector<1x4xf32>
    %20 = vector.broadcast %19 : vector<1x4xf32> to vector<32x4xf32>
    %21 = arith.addf %18, %20 : vector<32x4xf32>
    %22 = vector.extract_strided_slice %21 {offsets = [0, 0], sizes = [32, 2], strides = [1, 1]} : vector<32x4xf32> to vector<32x2xf32>
    %23 = vector.extract_strided_slice %21 {offsets = [0, 2], sizes = [32, 2], strides = [1, 1]} : vector<32x4xf32> to vector<32x2xf32>
    %cst_10 = arith.constant 5.000000e-01 : f32
    %24 = vector.broadcast %cst_10 : f32 to vector<32x2xf32>
    %25 = arith.mulf %24, %23 : vector<32x2xf32>
    %26 = math.exp %25 : vector<32x2xf32>
    %c0_11 = arith.constant 0 : index
    %c0_12 = arith.constant 0 : index
    %27 = vector.load %arg1[%c0_11, %c0_12] : memref<32x2xf32, #tpu.memory_space<vmem>>, vector<32x2xf32>
    %28 = arith.mulf %27, %26 : vector<32x2xf32>
    %29 = arith.addf %28, %22 : vector<32x2xf32>
    %c0_13 = arith.constant 0 : index
    %c0_14 = arith.constant 0 : index
    %30 = vector.load %arg7[%c0_13, %c0_14] : memref<32x2xf32, #tpu.memory_space<vmem>>, vector<32x2xf32>
    tpu.vector_store %arg7[%c0_13, %c0_14], %29 {strides = array<i32>} : memref<32x2xf32, #tpu.memory_space<vmem>>, vector<32x2xf32>,
    return
  }
  func.func @transform_0(%arg0: i32) -> (i32, i32) {
    %c0_i32 = arith.constant 0 : i32
    %c0_i32_0 = arith.constant 0 : i32
    return %arg0, %c0_i32 : i32, i32
  }
  func.func @transform_1(%arg0: i32) -> (i32, i32) {
    %c0_i32 = arith.constant 0 : i32
    %c0_i32_0 = arith.constant 0 : i32
    return %arg0, %c0_i32 : i32, i32
  }
  func.func @transform_2(%arg0: i32) -> (i32, i32) {
    %c0_i32 = arith.constant 0 : i32
    %c0_i32_0 = arith.constant 0 : i32
    %c0_i32_1 = arith.constant 0 : i32
    return %c0_i32, %c0_i32_0 : i32, i32
  }
  func.func @transform_3(%arg0: i32) -> (i32, i32) {
    %c0_i32 = arith.constant 0 : i32
    %c0_i32_0 = arith.constant 0 : i32
    %c0_i32_1 = arith.constant 0 : i32
    return %c0_i32, %c0_i32_0 : i32, i32
  }
  func.func @transform_4(%arg0: i32) -> (i32, i32) {
    %c0_i32 = arith.constant 0 : i32
    %c0_i32_0 = arith.constant 0 : i32
    %c0_i32_1 = arith.constant 0 : i32
    return %c0_i32, %c0_i32_0 : i32, i32
  }
  func.func @transform_5(%arg0: i32) -> (i32, i32) {
    %c0_i32 = arith.constant 0 : i32
    %c0_i32_0 = arith.constant 0 : i32
    %c0_i32_1 = arith.constant 0 : i32
    return %c0_i32, %c0_i32_0 : i32, i32
  }
  func.func @transform_6(%arg0: i32) -> (i32, i32) {
    %c0_i32 = arith.constant 0 : i32
    %c0_i32_0 = arith.constant 0 : i32
    return %arg0, %c0_i32 : i32, i32
  }
}

</mosaic_0001>

<llo_original>
// kernel: vae_forward.1
$region0: #{vae_forward.1}
  #allocation0 [shape = 'u32[]', space=smem, size = 0x4, offset = 0x4, fixed_abs, tag = 'smem constant byte address 0x4 - core index']
  #allocation1 [shape = 'u32[72,128]{1,0:T(1,128)}', space=vmem, size = 0x9000, scoped, tag = 'internal scratch']
  %s0 = inlined_call_operand.vmem [shape: f32[64,2], index: 0, kind: input, shape index: {}]
  %s1 = inlined_call_operand.vmem [shape: f32[64,2], index: 1, kind: input, shape index: {}]
  %s2 = inlined_call_operand.vmem [shape: f32[2,32], index: 2, kind: input, shape index: {}]
  %s3 = inlined_call_operand.vmem [shape: f32[1,32], index: 3, kind: input, shape index: {}]
  %s4 = inlined_call_operand.vmem [shape: bf16[32,4], index: 4, kind: input, shape index: {}]
  %s5 = inlined_call_operand.vmem [shape: f32[1,4], index: 5, kind: input, shape index: {}]
  %s6 = inlined_call_operand.vmem [shape: f32[64,2], index: 6, kind: output, shape index: {}]
  %s7 = sld [smem:[#allocation0]]
  $region57: #{vae_forward.1} parent=0
    _
  %s9 = ssub.s32 1, %s7
  %s10 = scalar_select 0, %s9, %s7
  loop: start=0, step=1, limit=4
  $region2: #{vae_forward.1} parent=0 // loop_pre_header
    _
  $region3: #{vae_forward.1} parent=0 // loop_header
    %s12 = sphi 0, %s16
    %p13 = scmp.ge.s32.totalorder %s12, 4
    %s22 = sphi 0, %s24
    %s25 = sphi 0, %s22
    %s26 = sphi 0, %s25
    %s42 = sphi 0, %s26
    %s48 = sphi 0, %s50
    %s51 = sphi 0, %s48
    %s52 = sphi 0, %s51
    %s68 = sphi 0, %s52
    %s72 = sphi 0, %s72
    %s74 = sphi 0, %s72
    %s75 = sphi 0, %s74
    %s89 = sphi 0, %s75
    %s93 = sphi 0, %s93
    %s95 = sphi 0, %s93
    %s96 = sphi 0, %s95
    %s110 = sphi 0, %s96
    %s114 = sphi 0, %s114
    %s116 = sphi 0, %s114
    %s117 = sphi 0, %s116
    %s131 = sphi 0, %s117
    %s135 = sphi 0, %s135
    %s137 = sphi 0, %s135
    %s138 = sphi 0, %s137
    %s152 = sphi 0, %s138
    %s158 = sphi 0, %s160
    %s161 = sphi 0, %s158
    %s162 = sphi 0, %s161
    %s178 = sphi 0, %s162
  $region4: #{vae_forward.1} parent=0 // loop_header_branch
    %15 = sbr.rel (%p13) target = $region8
  $region5: #{vae_forward.1} parent=0 // loop_body
    %s17 = ssub.s32 %s12, 1
    %s18 = ssub.s32 %s12, 2
    %s19 = sadd.s32 %s12, 1
    %s20 = ssub.s32 %s12, %s19
    %p21 = scmp.eq.s32.totalorder %s20, 0
    %s23 = sadd.s32 %s22, 1
    %s24 = scalar_select %p21, %s22, %s23
    %p27 = pneg %p21
    %p28 = scmp.eq.s32.totalorder %s12, 1
    %p29 = por %p27, %p28
    %p30 = scmp.ne.s32.totalorder %s22, %s25
    %p31 = scmp.eq.s32.totalorder %s12, 0
    %p32 = por %p30, %p31
    %p33 = scmp.ne.s32.totalorder %s22, %s25
    %p34 = scmp.eq.s32.totalorder %s17, 1
    %p35 = por %p33, %p34
    %p36 = scmp.ne.s32.totalorder %s25, %s26
    %p37 = scmp.eq.s32.totalorder %s17, 0
    %p38 = por %p36, %p37
    %p39 = scmp.ne.s32.totalorder %s25, %s26
    %p40 = scmp.eq.s32.totalorder %s18, 1
    %p41 = por %p39, %p40
    %p43 = scmp.ne.s32.totalorder %s26, %s42
    %p44 = scmp.eq.s32.totalorder %s18, 0
    %p45 = por %p43, %p44
    %s46 = ssub.s32 %s12, %s19
    %p47 = scmp.eq.s32.totalorder %s46, 0
    %s49 = sadd.s32 %s48, 1
    %s50 = scalar_select %p47, %s48, %s49
    %p53 = pneg %p47
    %p54 = scmp.eq.s32.totalorder %s12, 1
    %p55 = por %p53, %p54
    %p56 = scmp.ne.s32.totalorder %s48, %s51
    %p57 = scmp.eq.s32.totalorder %s12, 0
    %p58 = por %p56, %p57
    %p59 = scmp.ne.s32.totalorder %s48, %s51
    %p60 = scmp.eq.s32.totalorder %s17, 1
    %p61 = por %p59, %p60
    %p62 = scmp.ne.s32.totalorder %s51, %s52
    %p63 = scmp.eq.s32.totalorder %s17, 0
    %p64 = por %p62, %p63
    %p65 = scmp.ne.s32.totalorder %s51, %s52
    %p66 = scmp.eq.s32.totalorder %s18, 1
    %p67 = por %p65, %p66
    %p69 = scmp.ne.s32.totalorder %s52, %s68
    %p70 = scmp.eq.s32.totalorder %s18, 0
    %p71 = por %p69, %p70
    %s73 = sadd.s32 %s72, 1
    %p76 = scmp.eq.s32.totalorder %s12, 1
    %p77 = scmp.ne.s32.totalorder %s72, %s74
    %p78 = scmp.eq.s32.totalorder %s12, 0
    %p79 = por %p77, %p78
    %p80 = scmp.ne.s32.totalorder %s72, %s74
    %p81 = scmp.eq.s32.totalorder %s17, 1
    %p82 = por %p80, %p81
    %p83 = scmp.ne.s32.totalorder %s74, %s75
    %p84 = scmp.eq.s32.totalorder %s17, 0
    %p85 = por %p83, %p84
    %p86 = scmp.ne.s32.totalorder %s74, %s75
    %p87 = scmp.eq.s32.totalorder %s18, 1
    %p88 = por %p86, %p87
    %p90 = scmp.ne.s32.totalorder %s75, %s89
    %p91 = scmp.eq.s32.totalorder %s18, 0
    %p92 = por %p90, %p91
    %s94 = sadd.s32 %s93, 1
    %p97 = scmp.eq.s32.totalorder %s12, 1
    %p98 = scmp.ne.s32.totalorder %s93, %s95
    %p99 = scmp.eq.s32.totalorder %s12, 0
    %p100 = por %p98, %p99
    %p101 = scmp.ne.s32.totalorder %s93, %s95
    %p102 = scmp.eq.s32.totalorder %s17, 1
    %p103 = por %p101, %p102
    %p104 = scmp.ne.s32.totalorder %s95, %s96
    %p105 = scmp.eq.s32.totalorder %s17, 0
    %p106 = por %p104, %p105
    %p107 = scmp.ne.s32.totalorder %s95, %s96
    %p108 = scmp.eq.s32.totalorder %s18, 1
    %p109 = por %p107, %p108
    %p111 = scmp.ne.s32.totalorder %s96, %s110
    %p112 = scmp.eq.s32.totalorder %s18, 0
    %p113 = por %p111, %p112
    %s115 = sadd.s32 %s114, 1
    %p118 = scmp.eq.s32.totalorder %s12, 1
    %p119 = scmp.ne.s32.totalorder %s114, %s116
    %p120 = scmp.eq.s32.totalorder %s12, 0
    %p121 = por %p119, %p120
    %p122 = scmp.ne.s32.totalorder %s114, %s116
    %p123 = scmp.eq.s32.totalorder %s17, 1
    %p124 = por %p122, %p123
    %p125 = scmp.ne.s32.totalorder %s116, %s117
    %p126 = scmp.eq.s32.totalorder %s17, 0
    %p127 = por %p125, %p126
    %p128 = scmp.ne.s32.totalorder %s116, %s117
    %p129 = scmp.eq.s32.totalorder %s18, 1
    %p130 = por %p128, %p129
    %p132 = scmp.ne.s32.totalorder %s117, %s131
    %p133 = scmp.eq.s32.totalorder %s18, 0
    %p134 = por %p132, %p133
    %s136 = sadd.s32 %s135, 1
    %p139 = scmp.eq.s32.totalorder %s12, 1
    %p140 = scmp.ne.s32.totalorder %s135, %s137
    %p141 = scmp.eq.s32.totalorder %s12, 0
    %p142 = por %p140, %p141
    %p143 = scmp.ne.s32.totalorder %s135, %s137
    %p144 = scmp.eq.s32.totalorder %s17, 1
    %p145 = por %p143, %p144
    %p146 = scmp.ne.s32.totalorder %s137, %s138
    %p147 = scmp.eq.s32.totalorder %s17, 0
    %p148 = por %p146, %p147
    %p149 = scmp.ne.s32.totalorder %s137, %s138
    %p150 = scmp.eq.s32.totalorder %s18, 1
    %p151 = por %p149, %p150
    %p153 = scmp.ne.s32.totalorder %s138, %s152
    %p154 = scmp.eq.s32.totalorder %s18, 0
    %p155 = por %p153, %p154
    %s156 = ssub.s32 %s12, %s19
    %p157 = scmp.eq.s32.totalorder %s156, 0
    %s159 = sadd.s32 %s158, 1
    %s160 = scalar_select %p157, %s158, %s159
    %p163 = pneg %p157
    %p164 = scmp.eq.s32.totalorder %s12, 1
    %p165 = por %p163, %p164
    %p166 = scmp.ne.s32.totalorder %s158, %s161
    %p167 = scmp.eq.s32.totalorder %s12, 0
    %p168 = por %p166, %p167
    %p169 = scmp.ne.s32.totalorder %s158, %s161
    %p170 = scmp.eq.s32.totalorder %s17, 1
    %p171 = por %p169, %p170
    %p172 = scmp.ne.s32.totalorder %s161, %s162
    %p173 = scmp.eq.s32.totalorder %s17, 0
    %p174 = por %p172, %p173
    %p175 = scmp.ne.s32.totalorder %s161, %s162
    %p176 = scmp.eq.s32.totalorder %s18, 1
    %p177 = por %p175, %p176
    %p179 = scmp.ne.s32.totalorder %s162, %s178
    %p180 = scmp.eq.s32.totalorder %s18, 0
    %p181 = por %p179, %p180
    %p182 = scmp.le.s32.totalorder 1, %s12
    %p183 = scmp.lt.s32.totalorder %s12, 3
    %p184 = pnand %p182, %p183
    %p185 = pneg %p184
    // Predicated region
    $region9: #{vae_forward.1} parent=5 // pred_check
      _
    $region10: #{vae_forward.1} parent=5 // pred_check_branch
      %187 = sbr.rel (%p184) target = $region12
    $region11: #{vae_forward.1} parent=5 // pred_region
      %s188 = ssub.s32 %s12, 1
      // Predicated region
      $region13: #{vae_forward.1} parent=11 // pred_check
        %p189 = pneg %p85
      $region14: #{vae_forward.1} parent=11 // pred_check_branch
        %191 = sbr.rel (%p189) target = $region16
      $region15: #{vae_forward.1} parent=11 // pred_region
        _
      $region16: #{vae_forward.1} parent=11 // pred_fallthru
        _
      // Predicated region
      $region17: #{vae_forward.1} parent=11 // pred_check
        %p192 = pneg %p106
      $region18: #{vae_forward.1} parent=11 // pred_check_branch
        %194 = sbr.rel (%p192) target = $region20
      $region19: #{vae_forward.1} parent=11 // pred_region
        _
      $region20: #{vae_forward.1} parent=11 // pred_fallthru
        _
      // Predicated region
      $region21: #{vae_forward.1} parent=11 // pred_check
        %p195 = pneg %p127
      $region22: #{vae_forward.1} parent=11 // pred_check_branch
        %197 = sbr.rel (%p195) target = $region24
      $region23: #{vae_forward.1} parent=11 // pred_region
        _
      $region24: #{vae_forward.1} parent=11 // pred_fallthru
        _
      // Predicated region
      $region25: #{vae_forward.1} parent=11 // pred_check
        %p198 = pneg %p148
      $region26: #{vae_forward.1} parent=11 // pred_check_branch
        %200 = sbr.rel (%p198) target = $region28
      $region27: #{vae_forward.1} parent=11 // pred_region
        _
      $region28: #{vae_forward.1} parent=11 // pred_fallthru
        _
    $region12: #{vae_forward.1} parent=5 // pred_fallthru
      _
    %p201 = scmp.lt.s32.totalorder %s12, 2
    // Predicated region
    $region29: #{vae_forward.1} parent=5 // pred_check
      %p202 = pneg %p201
    $region30: #{vae_forward.1} parent=5 // pred_check_branch
      %204 = sbr.rel (%p202) target = $region32
    $region31: #{vae_forward.1} parent=5 // pred_region
      // Predicated region
      $region33: #{vae_forward.1} parent=31 // pred_check
        %p205 = pneg %p32
      $region34: #{vae_forward.1} parent=31 // pred_check_branch
        %207 = sbr.rel (%p205) target = $region36
      $region35: #{vae_forward.1} parent=31 // pred_region
        %s208 = smul.u32 4, %s12
        %p209 = scmp.lt.s32.totalorder %s208, 7
        %s210 = scalar_select %p209, %s208, 7
        %s211 = smul.addr %s210, 8
        %s212 = scalar_lea.vmem %s0, %s211
        %s213 = smul.u32 4, %s12
      $region36: #{vae_forward.1} parent=31 // pred_fallthru
        _
      // Predicated region
      $region37: #{vae_forward.1} parent=31 // pred_check
        %p214 = pneg %p58
      $region38: #{vae_forward.1} parent=31 // pred_check_branch
        %216 = sbr.rel (%p214) target = $region40
      $region39: #{vae_forward.1} parent=31 // pred_region
        %s217 = smul.u32 4, %s12
        %p218 = scmp.lt.s32.totalorder %s217, 7
        %s219 = scalar_select %p218, %s217, 7
        %s220 = smul.addr %s219, 8
        %s221 = scalar_lea.vmem %s1, %s220
        %s222 = smul.u32 4, %s12
      $region40: #{vae_forward.1} parent=31 // pred_fallthru
        _
    $region32: #{vae_forward.1} parent=5 // pred_fallthru
      _
    %p223 = scmp.le.s32.totalorder 1, %s12
    %p224 = scmp.lt.s32.totalorder %s12, 3
    %p225 = pnand %p223, %p224
    %p226 = pneg %p225
    // Predicated region
    $region41: #{vae_forward.1} parent=5 // pred_check
      _
    $region42: #{vae_forward.1} parent=5 // pred_check_branch
      %228 = sbr.rel (%p225) target = $region44
    $region43: #{vae_forward.1} parent=5 // pred_region
      %s229 = ssub.s32 %s12, 1
      %s230 = smul.u32 4, %s17
      %p231 = scmp.lt.s32.totalorder %s230, 7
      %s232 = scalar_select %p231, %s230, 7
      %s233 = smul.addr %s232, 8
      %s234 = scalar_lea.vmem %s0, %s233
      %p235 = pneg %p38
      %p236 = pneg %p35
      %s237 = smul.u32 4, %s17
      %p238 = scmp.lt.s32.totalorder %s237, 7
      %s239 = scalar_select %p238, %s237, 7
      %s240 = smul.addr %s239, 8
      %s241 = scalar_lea.vmem %s1, %s240
      %p242 = pneg %p64
      %p243 = pneg %p61
      %p244 = pneg %p85
      %p245 = pneg %p82
      %p246 = pneg %p106
      %p247 = pneg %p103
      %p248 = pneg %p127
      %p249 = pneg %p124
      %p250 = pneg %p148
      %p251 = pneg %p145
      %p252 = pneg %p174
      %p253 = pneg %p171
      %s254 = smul.u32 4, %s17
      %p255 = scmp.lt.s32.totalorder %s254, 7
      %s256 = scalar_select %p255, %s254, 7
      %s257 = smul.addr %s256, 8
      %s258 = scalar_lea.vmem %s6, %s257
      %s259 = smul.u32 4, %s17
      %p260 = scmp.lt.s32.totalorder %s259, 7
      %s261 = scalar_select %p260, %s259, 7
      %s262 = smul.addr %s261, 8
      %s263 = scalar_lea.vmem %s0, %s262
      %s264 = smul.u32 4, %s17
      %s265 = smul.u32 4, %s17
      %p266 = scmp.lt.s32.totalorder %s265, 7
      %s267 = scalar_select %p266, %s265, 7
      %s268 = smul.addr %s267, 8
      %s269 = scalar_lea.vmem %s1, %s268
      %s270 = smul.u32 4, %s17
      %s271 = smul.u32 4, %s17
      %p272 = scmp.lt.s32.totalorder %s271, 7
      %s273 = scalar_select %p272, %s271, 7
      %s274 = smul.addr %s273, 8
      %s275 = scalar_lea.vmem %s6, %s274
      %s276 = smul.u32 4, %s17
      %v278 = vld [vmem:[%s269] sm:$0xff]
      %v279 = vld [vmem:[%s269 + $0x8] sm:$0xff]
      %v280 = vld [vmem:[%s269 + $0x10] sm:$0xff]
      %v281 = vld [vmem:[%s269 + $0x18] sm:$0xff]
      %v282 = vld [vmem:[%s3] sm:$0x1]
      %v283 = vld [vmem:[%s2] sm:$0x1]
      %285 = vset.pattern.permute.xlu0 0
      %286 = vperm.xlu0 %285, %v278
      %v287 = vpop.permute.xlu0 %286
      %290 = vset.pattern.permute.xlu0 0
      %291 = vperm.xlu0 %290, %v279
      %v292 = vpop.permute.xlu0 %291
      %295 = vset.pattern.permute.xlu0 0
      %296 = vperm.xlu0 %295, %v280
      %v297 = vpop.permute.xlu0 %296
      %300 = vset.pattern.permute.xlu0 0
      %301 = vperm.xlu0 %300, %v281
      %v302 = vpop.permute.xlu0 %301
      %v304 = vperm.slane %v283, 0
      %v305 = vmul.f32 %v287, %v304
      %v306 = vmul.f32 %v292, %v304
      %v307 = vmul.f32 %v297, %v304
      %v308 = vmul.f32 %v302, %v304
      %v310 = vperm.slane %v282, 0
      %v312 = vadd.f32 %v310, %v305
      %v313 = vadd.f32 %v310, %v306
      %v314 = vadd.f32 %v310, %v307
      %v315 = vadd.f32 %v310, %v308
      %v316 = vld [vmem:[%s2 + $0x1] sm:$0x1]
      %317 = vset.pattern.permute.xlu0 1
      %318 = vperm.xlu0 %317, %v278
      %v319 = vpop.permute.xlu0 %318
      %321 = vset.pattern.permute.xlu0 1
      %322 = vperm.xlu0 %321, %v279
      %v323 = vpop.permute.xlu0 %322
      %325 = vset.pattern.permute.xlu0 1
      %326 = vperm.xlu0 %325, %v280
      %v327 = vpop.permute.xlu0 %326
      %329 = vset.pattern.permute.xlu0 1
      %330 = vperm.xlu0 %329, %v281
      %v331 = vpop.permute.xlu0 %330
      %v333 = vperm.slane %v316, 0
      %v334 = vmul.f32 %v319, %v333
      %v335 = vmul.f32 %v323, %v333
      %v336 = vmul.f32 %v327, %v333
      %v337 = vmul.f32 %v331, %v333
      %v338 = vadd.f32 %v312, %v334
      %v339 = vadd.f32 %v313, %v335
      %v340 = vadd.f32 %v314, %v336
      %v341 = vadd.f32 %v315, %v337
      %v342 = vtanh.pop %v338
      %v343 = vtanh.pop %v339
      %v344 = vtanh.pop %v340
      %v345 = vtanh.pop %v341
      %v346 = vpack.c.bf16 %v343, %v342
      %v347 = vpack.c.bf16 %v345, %v344
      %v348 = vld [vmem:[%s4] sm:$0xf]
      %v349 = vld [vmem:[%s4 + $0x4] sm:$0xf]
      %v350 = vld [vmem:[%s4 + $0x8] sm:$0xf]
      %v351 = vld [vmem:[%s4 + $0xc] sm:$0xf]
      %v352 = vld [vmem:[%s5] sm:$0x1]
      %v354 = vperm.slane %v352, 0
      %v360 = vunpack.c.l.b16 %v348
      %v361 = vunpack.c.l.b16 %v349
      %v362 = vunpack.c.l.b16 %v350
      %v363 = vunpack.c.l.b16 %v351
      %v364 = vpack.c.b16 %v361, %v360
      %v365 = vpack.c.b16 %v363, %v362
      %vm368 = vcmask 261120
      %v370 = vsel %vm368, %v346, 0
      %v373 = vsel %vm368, %v347, 0
      %375 = vmatpush.bf16.msra.mxu0 0
      %376 = vmatpush.bf16.msra.mxu0 0
      %377 = vmatpush.bf16.msra.mxu0 0
      %378 = vmatpush.bf16.msra.mxu0 0
      %379 = vmatpush.bf16.msra.mxu0 0
      %380 = vmatpush.bf16.msra.mxu0 0
      %381 = vmatpush.bf16.msra.mxu0 %v365
      %382 = vmatpush.bf16.msra.mxu0 %v364
      %383 = vmatmul.bf16.gmra.mxu0 %v370
      %v384 = vpop.f32.mrf.mxu0
      %v385 = vadd.f32 %v354, %v384
      %v386 = vpop.f32.mrf.mxu0
      %v387 = vadd.f32 %v354, %v386
      %388 = vmatmul.bf16.gmra.mxu0 %v373
      %v389 = vpop.f32.mrf.mxu0
      %v390 = vadd.f32 %v354, %v389
      %v391 = vpop.f32.mrf.mxu0
      %v392 = vadd.f32 %v354, %v391
      %393 = vdwg.mxu0
      %v394 = vmul.f32 %v385, 0.5
      %v395 = vmul.f32 %v387, 0.5
      %v396 = vmul.f32 %v390, 0.5
      %v397 = vmul.f32 %v392, 0.5
      %v398 = vmul.f32 %v394, 1.442695
      %v399 = vpow.pop %v398
      %v400 = vmul.f32 %v395, 1.442695
      %v401 = vpow.pop %v400
      %v402 = vmul.f32 %v396, 1.442695
      %v403 = vpow.pop %v402
      %v404 = vmul.f32 %v397, 1.442695
      %v405 = vpow.pop %v404
      %v406 = vld [vmem:[%s263] sm:$0xff]
      %v407 = vld [vmem:[%s263 + $0x8] sm:$0xff]
      %v408 = vld [vmem:[%s263 + $0x10] sm:$0xff]
      %v409 = vld [vmem:[%s263 + $0x18] sm:$0xff]
      %414 = vrot.lane.b32.xlu0 %v399, 126
      %v415 = vpop.permute.xlu0 %414
      %416 = vrot.lane.b32.xlu0 %v401, 126
      %v417 = vpop.permute.xlu0 %416
      %418 = vrot.lane.b32.xlu0 %v403, 126
      %v419 = vpop.permute.xlu0 %418
      %420 = vrot.lane.b32.xlu0 %v405, 126
      %v421 = vpop.permute.xlu0 %420
      %v426 = vmul.f32 %v406, %v415
      %v427 = vmul.f32 %v407, %v417
      %v428 = vmul.f32 %v408, %v419
      %v429 = vmul.f32 %v409, %v421
      %v430 = vadd.f32 %v426, %v385
      %v431 = vadd.f32 %v427, %v387
      %v432 = vadd.f32 %v428, %v390
      %v433 = vadd.f32 %v429, %v392
      %vm434 = vcmask 15360
      %435 = vst.msk [vmem:[%s275] sm:$0xff] %vm434, %v430
      %436 = vst.msk [vmem:[%s275 + $0x8] sm:$0xff] %vm434, %v431
      %437 = vst.msk [vmem:[%s275 + $0x10] sm:$0xff] %vm434, %v432
      %438 = vst.msk [vmem:[%s275 + $0x18] sm:$0xff] %vm434, %v433
      %s439 = smul.u32 4, %s17
      %p440 = scmp.lt.s32.totalorder %s439, 7
      %s441 = scalar_select %p440, %s439, 7
      %s442 = smul.addr %s441, 8
      %s443 = scalar_lea.vmem %s6, %s442
      // Predicated region
      $region45: #{vae_forward.1} parent=43 // pred_check
        %p444 = pneg %p171
      $region46: #{vae_forward.1} parent=43 // pred_check_branch
        %446 = sbr.rel (%p444) target = $region48
      $region47: #{vae_forward.1} parent=43 // pred_region
        %s447 = smul.u32 4, %s17
      $region48: #{vae_forward.1} parent=43 // pred_fallthru
        _
    $region44: #{vae_forward.1} parent=5 // pred_fallthru
      _
    %p448 = scmp.le.s32.totalorder 2, %s12
    // Predicated region
    $region49: #{vae_forward.1} parent=5 // pred_check
      %p449 = pneg %p448
    $region50: #{vae_forward.1} parent=5 // pred_check_branch
      %451 = sbr.rel (%p449) target = $region52
    $region51: #{vae_forward.1} parent=5 // pred_region
      %s452 = ssub.s32 %s12, 2
      // Predicated region
      $region53: #{vae_forward.1} parent=51 // pred_check
        %p453 = pneg %p177
      $region54: #{vae_forward.1} parent=51 // pred_check_branch
        %455 = sbr.rel (%p453) target = $region56
      $region55: #{vae_forward.1} parent=51 // pred_region
        %s456 = smul.u32 4, %s18
        %p457 = scmp.lt.s32.totalorder %s456, 7
        %s458 = scalar_select %p457, %s456, 7
        %s459 = smul.addr %s458, 8
        %s460 = scalar_lea.vmem %s6, %s459
      $region56: #{vae_forward.1} parent=51 // pred_fallthru
        _
    $region52: #{vae_forward.1} parent=5 // pred_fallthru
      _
  $region6: #{vae_forward.1} parent=0 // loop_footer
    %s16 = sadd.s32 1, %s12
  $region7: #{vae_forward.1} parent=0 // loop_footer_branch
    %11 = sbr.rel target = $region3
  $region8: #{vae_forward.1} parent=0 // loop_exit
    _

</llo_original>
